<compile_context>
chip_gen: v5e
topology: v5e:2x2
jax: 0.10.0
libtpu: 0.0.40
codegen_flags: <defaults>
</compile_context>

<pallas_src>
import jax
import jax.numpy as jnp
from jax import lax
from jax.experimental import pallas as pl
from jax.experimental.pallas import tpu as pltpu

# ----------------------------- model dimensions ------------------------------
IN_DIM, H1, H2, H3, OUT_DIM = 3, 128, 128, 50, 2

IN_PAD = 8        # packed x lanes: [y0, y1, v-slot, t, 1.0, 0, 0, 0]
H3_PAD = 128      # 50 -> 128 (fully lane-dense layer 3 / 4)
OUT_PAD = 128     # lane-dense output slab; real outputs in lanes 0..1

LANE_Y0, LANE_Y1, LANE_V, LANE_T, LANE_ONE = 0, 1, 2, 3, 4

# deterministic synthetic v_interpolation: uniform 16-point grid on [0, 0.084]
T_MAX = 0.084
N_GRID = 16
INV_DT = (N_GRID - 1) / T_MAX
T_GRID_PAD = 1.0e6    # sentinel for padded grid lanes -> hat weight exactly 0


def _approx_sigmoid(z):
    # exp and approximate reciprocal both run on the EUP slot (VPU stays free).
    return pl.reciprocal(1.0 + jnp.exp(-z), approx=True)


# ------------------------------- Pallas kernel --------------------------------
def odefunc_kernel(x_ref, c_ref, w1_ref, w2_ref, w3_ref, w4_ref, o_ref):
    # packed x slab: lanes [y0, y1, 0(v-slot), t, 1.0, 0, 0, 0]
    x = x_ref[...]                                              # (tb, 8) f32

    # ---- glue: clip + uniform-grid linear interpolation, all in-kernel ----
    t = jnp.clip(x[:, LANE_T:LANE_T + 1], 0.0, T_MAX)           # (tb, 1)
    # hat-basis weights over the padded 128-lane grid row; padded lanes hold a
    # huge sentinel so their weight is exactly 0 (== jnp.interp after clipping).
    hat = jnp.maximum(0.0, 1.0 - jnp.abs(t - c_ref[3:4, :]) * INV_DT)   # (tb, 128)
    v = jnp.sum(hat * c_ref[4:5, :], axis=-1, keepdims=True)            # (tb, 1)

    lane = lax.broadcasted_iota(jnp.int32, x.shape, 1)          # (tb, 8)
    x = jnp.where(lane == LANE_V, v, x)                         # drop v into lane 2

    # ---- fused 4-layer MLP; bf16 MXU operands, f32 accumulate & element-wise ----
    w1 = w1_ref[...].astype(jnp.bfloat16)                       # b1 folded into row LANE_ONE
    h1 = _approx_sigmoid(
        jnp.dot(x.astype(jnp.bfloat16), w1, preferred_element_type=jnp.float32))
    h2 = _approx_sigmoid(
        jnp.dot(h1.astype(jnp.bfloat16), w2_ref[...],
                preferred_element_type=jnp.float32) + c_ref[0:1, :])     # + b2
    h3 = _approx_sigmoid(
        jnp.dot(h2.astype(jnp.bfloat16), w3_ref[...],
                preferred_element_type=jnp.float32) + c_ref[1:2, :])     # + b3
    # padded h3 lanes (50..127) are sigmoid(0)=0.5 but hit exactly-zero W4 rows.
    o_ref[...] = (
        jnp.dot(h3.astype(jnp.bfloat16), w4_ref[...],
                preferred_element_type=jnp.float32) + c_ref[2:3, :])     # + b4


# ------------------------------ tiling & call ---------------------------------
def _round_up(n, m):
    return ((n + m - 1) // m) * m


def _choose_tiling(n_rows):
    """Return (tile_b, n_pad): rows per grid step and total padded rows."""
    n8 = max(8, _round_up(n_rows, 8))
    if n8 <= 256:
        return n8, n8
    # >= 2 grid steps so "parallel" shards across both v7x TensorCores;
    # 512-1024-row tiles sit near the measured 85% HBM-roofline point.
    tile = min(1024, max(256, _round_up(n8 // 2, 8)))
    return tile, _round_up(n8, tile)


def _build_call(n_pad, tile_b):
    const = lambda b: (0, 0)        # weights / const slab: VMEM-resident across steps
    in_specs = [
        pl.BlockSpec((tile_b, IN_PAD), lambda b: (b, 0)),   # packed x (y, v-slot, t, 1)
        pl.BlockSpec((8, 128), const),                      # consts: b2|b3|b4|t_grid|v_vals
        pl.BlockSpec((IN_PAD, H1), const),                  # W1 (f32, b1 folded)
        pl.BlockSpec((H1, H2), const),                      # W2 (bf16)
        pl.BlockSpec((H2, H3_PAD), const),                  # W3 (bf16)
        pl.BlockSpec((H3_PAD, OUT_PAD), const),             # W4 (bf16)
    ]
    out_specs = pl.BlockSpec((tile_b, OUT_PAD), lambda b: (b, 0))
    return pl.pallas_call(
        odefunc_kernel,
        grid=(n_pad // tile_b,),
        in_specs=in_specs,
        out_specs=out_specs,
        out_shape=jax.ShapeDtypeStruct((n_pad, OUT_PAD), jnp.float32),
        compiler_params=pltpu.CompilerParams(dimension_semantics=("parallel",)),
    )


def _forward_rows(params, t_rows, y_rows):
    """t_rows (N,), y_rows (N, 2)  ->  (N, 2).  Whole path is jit'ed."""
    consts, w1, w2, w3, w4 = params
    n = y_rows.shape[0]
    tile_b, n_pad = _choose_tiling(n)

    t_col = t_rows.astype(jnp.float32).reshape(n, 1)
    y_mat = y_rows.astype(jnp.float32).reshape(n, OUT_DIM)
    x = jnp.concatenate(
        [y_mat,                                    # lanes 0,1: y
         jnp.zeros((n, 1), jnp.float32),           # lane 2: v slot (filled in-kernel)
         t_col,                                    # lane 3: t (clipped in-kernel)
         jnp.ones((n, 1), jnp.float32),            # lane 4: constant 1 (bias lane)
         jnp.zeros((n, IN_PAD - 5), jnp.float32)], axis=1)
    x = lax.pad(x, jnp.float32(0.0), ((0, n_pad - n, 0), (0, 0, 0)))

    out_pad = _build_call(n_pad, tile_b)(x, consts, w1, w2, w3, w4)
    # TODO(synk): at very large batch, fuse this slice into the consumer (or hand the
    # padded slab downstream) to avoid reading back the 64x-inflated output in XLA.
    return out_pad[:n, :OUT_DIM]


def _pad2d(a, rows, cols):
    return jnp.zeros((rows, cols), jnp.float32).at[:a.shape[0], :a.shape[1]].set(a)


# ------------------------------- module wrapper --------------------------------
class ODEFuncVPallas:
    """JAX/Pallas port of ODEFuncV with deterministically initialized params."""

    DIMS = [IN_DIM, H1, H2, H3, OUT_DIM]

    def __init__(self, key):
        keys = jax.random.split(key, 4)
        ws, bs = [], []
        for i in range(4):
            fan_in, fan_out = self.DIMS[i], self.DIMS[i + 1]
            # PyTorch: normal_(weight, std=0.1), bias = 0; stored (in, out) for x @ W.
            ws.append(0.1 * jax.random.normal(keys[i], (fan_in, fan_out), jnp.float32))
            bs.append(jnp.zeros((fan_out,), jnp.float32))
        self.ws, self.bs = ws, bs

        # W1: f32 (8,128); rows 0..2 = weight, row LANE_ONE = b1, rows 3,5..7 = 0.
        w1p = _pad2d(ws[0], IN_PAD, H1).at[LANE_ONE, :].set(bs[0])
        # W2/W3/W4 stored bf16 (halved DMA / VMEM); zero-padded lanes stay exactly 0.
        w2p = ws[1].astype(jnp.bfloat16)
        w3p = _pad2d(ws[2], H2, H3_PAD).astype(jnp.bfloat16)
        w4p = _pad2d(ws[3], H3_PAD, OUT_PAD).astype(jnp.bfloat16)

        # Deterministic synthetic v_interpolation: linear interp over uniform [0, 0.084].
        # TODO(synk): the real v_interpolation is an arbitrary host callable; only a
        # uniform-grid linear-interp table is representable in-kernel.
        self.t_grid = jnp.linspace(0.0, T_MAX, N_GRID).astype(jnp.float32)
        self.v_vals = (jnp.sin(self.t_grid * 50.0) + 0.5 * self.t_grid).astype(jnp.float32)

        consts = jnp.full((8, 128), 0.0, jnp.float32)
        consts = consts.at[0, :H2].set(bs[1])                 # b2
        consts = consts.at[1, :H3].set(bs[2])                 # b3 (padded lanes 0)
        consts = consts.at[2, :OUT_DIM].set(bs[3])            # b4 (padded lanes 0)
        consts = consts.at[3, :].set(T_GRID_PAD)              # sentinel -> hat weight 0
        consts = consts.at[3, :N_GRID].set(self.t_grid)       # t grid
        consts = consts.at[4, :N_GRID].set(self.v_vals)       # v values

        self.params = (consts, w1p, w2p, w3p, w4p)
        self._rows = jax.jit(_forward_rows)   # clip+interp+concat+MLP all inside

    def v_interpolation(self, t):
        return jnp.interp(t, self.t_grid, self.v_vals)

    def __call__(self, t_cur, y):
        """Matches ODEFuncV.forward: t_cur (B,), y (B,1,2) -> (B,1,2)."""
        b = y.shape[0]
        out = self._rows(self.params, jnp.reshape(t_cur, (b,)), jnp.reshape(y, (b, OUT_DIM)))
        return out.reshape(b, 1, OUT_DIM)

    def eval_stages(self, t_stages, y_stages):
        """Fused multi-evaluation: t (S,B), y (S,B,1,2) -> (S,B,1,2).

        All S*B rows are independent, so RK stages / solver sub-steps flatten onto
        the batch grid axis of a single pallas_call: one launch, weights DMA'd once
        and VMEM-resident for every stage."""
        s, b = t_stages.shape
        out = self._rows(self.params,
                         jnp.reshape(t_stages, (s * b,)),
                         jnp.reshape(y_stages, (s * b, OUT_DIM)))
        return out.reshape(s, b, 1, OUT_DIM)


# ------------------------- pure-JAX reference check ---------------------------
def reference_forward(model, t_cur, y):
    batch = y.shape[0]
    t = jnp.clip(t_cur.astype(jnp.float32), 0.0, T_MAX)
    v = model.v_interpolation(t).astype(jnp.float32)[:, None]
    h = jnp.concatenate([y.astype(jnp.float32).reshape(batch, OUT_DIM), v], axis=1)
    for i in range(4):
        h = h @ model.ws[i] + model.bs[i]
        if i < 3:
            h = jax.nn.sigmoid(h)
    return h.reshape(batch, 1, OUT_DIM)


if __name__ == "__main__":
    key = jax.random.PRNGKey(0)
    k_model, k_y, k_t, k_y2, k_t2, k_ys, k_ts = jax.random.split(key, 7)

    model = ODEFuncVPallas(k_model)
    TOL = dict(atol=2e-2, rtol=2e-2)   # bf16 MXU operands + EUP approx reciprocal

    # small shapes consistent with the module: y (B, 1, 2), t_cur (B,)
    B = 2
    y = jax.random.normal(k_y, (B, 1, 2), jnp.float32)
    t_cur = jax.random.uniform(k_t, (B,), jnp.float32, minval=-0.02, maxval=0.12)
    out = jax.block_until_ready(model(t_cur, y))
    ref = reference_forward(model, t_cur, y)
    assert out.shape == (B, 1, 2), out.shape
    assert jnp.allclose(out, ref, **TOL), (out, ref)

    # B > 8 path
    B2 = 10
    y2 = jax.random.normal(k_y2, (B2, 1, 2), jnp.float32)
    t2 = jax.random.uniform(k_t2, (B2,), jnp.float32, minval=-0.02, maxval=0.12)
    out2 = jax.block_until_ready(model(t2, y2))
    ref2 = reference_forward(model, t2, y2)
    assert out2.shape == (B2, 1, 2), out2.shape
    assert jnp.allclose(out2, ref2, **TOL), (out2, ref2)

    # fused multi-stage evaluation (4 RK stages x batch 2) in a single pallas_call
    S, B3 = 4, 2
    ys = jax.random.normal(k_ys, (S, B3, 1, 2), jnp.float32)
    ts = jax.random.uniform(k_ts, (S, B3), jnp.float32, minval=-0.02, maxval=0.12)
    outs = jax.block_until_ready(model.eval_stages(ts, ys))
    refs = jnp.stack([reference_forward(model, ts[i], ys[i]) for i in range(S)])
    assert outs.shape == (S, B3, 1, 2), outs.shape
    assert jnp.allclose(outs, refs, **TOL), (outs, refs)

    print("KERNEL_OK")
</pallas_src>

<mosaic_0001>
module attributes {stable_mosaic.version = 11 : i64} {
  func.func @odefunc_kernel(%arg0: i32, %arg1: memref<8x8xf32, #tpu.memory_space<vmem>>, %arg2: memref<8x128xf32, #tpu.memory_space<vmem>>, %arg3: memref<8x128xf32, #tpu.memory_space<vmem>>, %arg4: memref<128x128xbf16, #tpu.memory_space<vmem>>, %arg5: memref<128x128xbf16, #tpu.memory_space<vmem>>, %arg6: memref<128x128xbf16, #tpu.memory_space<vmem>>, %arg7: memref<8x128xf32, #tpu.memory_space<vmem>>) attributes {dimension_semantics = [#tpu.dimension_semantics<parallel>], iteration_bounds = array<i64: 1>, scalar_prefetch = 0 : i64, scratch_operands = 0 : i64, tpu.core_type = #tpu.core_type<tc>, window_params = [{transform_indices = @transform_0, window_bounds = array<i64: 8, 8>}, {pipeline_mode = #tpu.pipeline_mode<synchronous>, transform_indices = @transform_1, window_bounds = array<i64: 8, 128>}, {pipeline_mode = #tpu.pipeline_mode<synchronous>, transform_indices = @transform_2, window_bounds = array<i64: 8, 128>}, {pipeline_mode = #tpu.pipeline_mode<synchronous>, transform_indices = @transform_3, window_bounds = array<i64: 128, 128>}, {pipeline_mode = #tpu.pipeline_mode<synchronous>, transform_indices = @transform_4, window_bounds = array<i64: 128, 128>}, {pipeline_mode = #tpu.pipeline_mode<synchronous>, transform_indices = @transform_5, window_bounds = array<i64: 128, 128>}, {transform_indices = @transform_6, window_bounds = array<i64: 8, 128>}]} {
    %c0 = arith.constant 0 : index
    %c0_0 = arith.constant 0 : index
    %0 = vector.load %arg1[%c0, %c0_0] : memref<8x8xf32, #tpu.memory_space<vmem>>, vector<8x8xf32>
    %1 = vector.extract_strided_slice %0 {offsets = [0, 3], sizes = [8, 1], strides = [1, 1]} : vector<8x8xf32> to vector<8x1xf32>
    %cst = arith.constant 0.000000e+00 : f32
    %cst_1 = arith.constant 0.0839999988 : f32
    %2 = vector.broadcast %cst : f32 to vector<8x1xf32>
    %3 = arith.maximumf %2, %1 : vector<8x1xf32>
    %4 = vector.broadcast %cst_1 : f32 to vector<8x1xf32>
    %5 = arith.minimumf %4, %3 : vector<8x1xf32>
    %c3 = arith.constant 3 : index
    %c0_2 = arith.constant 0 : index
    %6 = vector.load %arg2[%c3, %c0_2] : memref<8x128xf32, #tpu.memory_space<vmem>>, vector<1x128xf32>
    %7 = vector.broadcast %5 : vector<8x1xf32> to vector<8x128xf32>
    %8 = vector.broadcast %6 : vector<1x128xf32> to vector<8x128xf32>
    %9 = arith.subf %7, %8 : vector<8x128xf32>
    %10 = math.absf %9 : vector<8x128xf32>
    %cst_3 = arith.constant 178.571426 : f32
    %11 = vector.broadcast %cst_3 : f32 to vector<8x128xf32>
    %12 = arith.mulf %10, %11 : vector<8x128xf32>
    %cst_4 = arith.constant 1.000000e+00 : f32
    %13 = vector.broadcast %cst_4 : f32 to vector<8x128xf32>
    %14 = arith.subf %13, %12 : vector<8x128xf32>
    %cst_5 = arith.constant 0.000000e+00 : f32
    %15 = vector.broadcast %cst_5 : f32 to vector<8x128xf32>
    %16 = arith.maximumf %15, %14 : vector<8x128xf32>
    %c4 = arith.constant 4 : index
    %c0_6 = arith.constant 0 : index
    %17 = vector.load %arg2[%c4, %c0_6] : memref<8x128xf32, #tpu.memory_space<vmem>>, vector<1x128xf32>
    %18 = vector.broadcast %17 : vector<1x128xf32> to vector<8x128xf32>
    %19 = arith.mulf %16, %18 : vector<8x128xf32>
    %cst_7 = arith.constant dense<0.000000e+00> : vector<8xf32>
    %20 = vector.multi_reduction <add>, %19, %cst_7 [1] : vector<8x128xf32> to vector<8xf32>
    %21 = vector.shape_cast %20 : vector<8xf32> to vector<8x1xf32>
    %22 = tpu.iota {dimensions = array<i32: 1>} : vector<8x8xi32>
    %c2_i32 = arith.constant 2 : i32
    %23 = vector.broadcast %c2_i32 : i32 to vector<8x8xi32>
    %24 = arith.cmpi eq, %22, %23 : vector<8x8xi32>
    %25 = vector.shape_cast %21 : vector<8x1xf32> to vector<8x1xf32>
    %26 = vector.broadcast %25 : vector<8x1xf32> to vector<8x8xf32>
    %27 = arith.select %24, %26, %0 : vector<8x8xi1>, vector<8x8xf32>
    %c0_8 = arith.constant 0 : index
    %c0_9 = arith.constant 0 : index
    %28 = vector.load %arg3[%c0_8, %c0_9] : memref<8x128xf32, #tpu.memory_space<vmem>>, vector<8x128xf32>
    %29 = arith.truncf %28 : vector<8x128xf32> to vector<8x128xbf16>
    %30 = arith.truncf %27 : vector<8x8xf32> to vector<8x8xbf16>
    %cst_10 = arith.constant dense<0.000000e+00> : vector<8x128xf32>
    %31 = tpu.matmul %30, %29, %cst_10 {dimension_numbers = #tpu.dot_dimension_numbers<[1], [0], [0], [1], [0, 0, 1, 1], [], []>} : vector<8x8xbf16>, vector<8x128xbf16>, vector<8x128xf32> -> vector<8x128xf32>
    %cst_11 = arith.constant 0.000000e+00 : f32
    %32 = vector.broadcast %cst_11 : f32 to vector<8x128xf32>
    %33 = arith.subf %32, %31 : vector<8x128xf32>
    %34 = math.exp %33 : vector<8x128xf32>
    %cst_12 = arith.constant 1.000000e+00 : f32
    %35 = vector.broadcast %cst_12 : f32 to vector<8x128xf32>
    %36 = arith.addf %35, %34 : vector<8x128xf32>
    %37 = tpu.reciprocal %36 {approx = true} : vector<8x128xf32> -> vector<8x128xf32>
    %38 = arith.truncf %37 : vector<8x128xf32> to vector<8x128xbf16>
    %c0_13 = arith.constant 0 : index
    %c0_14 = arith.constant 0 : index
    %39 = vector.load %arg4[%c0_13, %c0_14] : memref<128x128xbf16, #tpu.memory_space<vmem>>, vector<128x128xbf16>
    %cst_15 = arith.constant dense<0.000000e+00> : vector<8x128xf32>
    %40 = tpu.matmul %38, %39, %cst_15 {dimension_numbers = #tpu.dot_dimension_numbers<[1], [0], [0], [1], [0, 0, 1, 1], [], []>} : vector<8x128xbf16>, vector<128x128xbf16>, vector<8x128xf32> -> vector<8x128xf32>
    %c0_16 = arith.constant 0 : index
    %c0_17 = arith.constant 0 : index
    %41 = vector.load %arg2[%c0_16, %c0_17] : memref<8x128xf32, #tpu.memory_space<vmem>>, vector<1x128xf32>
    %42 = vector.broadcast %41 : vector<1x128xf32> to vector<8x128xf32>
    %43 = arith.addf %40, %42 : vector<8x128xf32>
    %cst_18 = arith.constant 0.000000e+00 : f32
    %44 = vector.broadcast %cst_18 : f32 to vector<8x128xf32>
    %45 = arith.subf %44, %43 : vector<8x128xf32>
    %46 = math.exp %45 : vector<8x128xf32>
    %cst_19 = arith.constant 1.000000e+00 : f32
    %47 = vector.broadcast %cst_19 : f32 to vector<8x128xf32>
    %48 = arith.addf %47, %46 : vector<8x128xf32>
    %49 = tpu.reciprocal %48 {approx = true} : vector<8x128xf32> -> vector<8x128xf32>
    %50 = arith.truncf %49 : vector<8x128xf32> to vector<8x128xbf16>
    %c0_20 = arith.constant 0 : index
    %c0_21 = arith.constant 0 : index
    %51 = vector.load %arg5[%c0_20, %c0_21] : memref<128x128xbf16, #tpu.memory_space<vmem>>, vector<128x128xbf16>
    %cst_22 = arith.constant dense<0.000000e+00> : vector<8x128xf32>
    %52 = tpu.matmul %50, %51, %cst_22 {dimension_numbers = #tpu.dot_dimension_numbers<[1], [0], [0], [1], [0, 0, 1, 1], [], []>} : vector<8x128xbf16>, vector<128x128xbf16>, vector<8x128xf32> -> vector<8x128xf32>
    %c1 = arith.constant 1 : index
    %c0_23 = arith.constant 0 : index
    %53 = vector.load %arg2[%c1, %c0_23] : memref<8x128xf32, #tpu.memory_space<vmem>>, vector<1x128xf32>
    %54 = vector.broadcast %53 : vector<1x128xf32> to vector<8x128xf32>
    %55 = arith.addf %52, %54 : vector<8x128xf32>
    %cst_24 = arith.constant 0.000000e+00 : f32
    %56 = vector.broadcast %cst_24 : f32 to vector<8x128xf32>
    %57 = arith.subf %56, %55 : vector<8x128xf32>
    %58 = math.exp %57 : vector<8x128xf32>
    %cst_25 = arith.constant 1.000000e+00 : f32
    %59 = vector.broadcast %cst_25 : f32 to vector<8x128xf32>
    %60 = arith.addf %59, %58 : vector<8x128xf32>
    %61 = tpu.reciprocal %60 {approx = true} : vector<8x128xf32> -> vector<8x128xf32>
    %62 = arith.truncf %61 : vector<8x128xf32> to vector<8x128xbf16>
    %c0_26 = arith.constant 0 : index
    %c0_27 = arith.constant 0 : index
    %63 = vector.load %arg6[%c0_26, %c0_27] : memref<128x128xbf16, #tpu.memory_space<vmem>>, vector<128x128xbf16>
    %cst_28 = arith.constant dense<0.000000e+00> : vector<8x128xf32>
    %64 = tpu.matmul %62, %63, %cst_28 {dimension_numbers = #tpu.dot_dimension_numbers<[1], [0], [0], [1], [0, 0, 1, 1], [], []>} : vector<8x128xbf16>, vector<128x128xbf16>, vector<8x128xf32> -> vector<8x128xf32>
    %c2 = arith.constant 2 : index
    %c0_29 = arith.constant 0 : index
    %65 = vector.load %arg2[%c2, %c0_29] : memref<8x128xf32, #tpu.memory_space<vmem>>, vector<1x128xf32>
    %66 = vector.broadcast %65 : vector<1x128xf32> to vector<8x128xf32>
    %67 = arith.addf %64, %66 : vector<8x128xf32>
    %c0_30 = arith.constant 0 : index
    %c0_31 = arith.constant 0 : index
    %68 = vector.load %arg7[%c0_30, %c0_31] : memref<8x128xf32, #tpu.memory_space<vmem>>, vector<8x128xf32>
    tpu.vector_store %arg7[%c0_30, %c0_31], %67 {strides = array<i32>} : memref<8x128xf32, #tpu.memory_space<vmem>>, vector<8x128xf32>,
    return
  }
  func.func @transform_0(%arg0: i32) -> (i32, i32) {
    %c0_i32 = arith.constant 0 : i32
    %c0_i32_0 = arith.constant 0 : i32
    return %arg0, %c0_i32 : i32, i32
  }
  func.func @transform_1(%arg0: i32) -> (i32, i32) {
    %c0_i32 = arith.constant 0 : i32
    %c0_i32_0 = arith.constant 0 : i32
    %c0_i32_1 = arith.constant 0 : i32
    return %c0_i32, %c0_i32_0 : i32, i32
  }
  func.func @transform_2(%arg0: i32) -> (i32, i32) {
    %c0_i32 = arith.constant 0 : i32
    %c0_i32_0 = arith.constant 0 : i32
    %c0_i32_1 = arith.constant 0 : i32
    return %c0_i32, %c0_i32_0 : i32, i32
  }
  func.func @transform_3(%arg0: i32) -> (i32, i32) {
    %c0_i32 = arith.constant 0 : i32
    %c0_i32_0 = arith.constant 0 : i32
    %c0_i32_1 = arith.constant 0 : i32
    return %c0_i32, %c0_i32_0 : i32, i32
  }
  func.func @transform_4(%arg0: i32) -> (i32, i32) {
    %c0_i32 = arith.constant 0 : i32
    %c0_i32_0 = arith.constant 0 : i32
    %c0_i32_1 = arith.constant 0 : i32
    return %c0_i32, %c0_i32_0 : i32, i32
  }
  func.func @transform_5(%arg0: i32) -> (i32, i32) {
    %c0_i32 = arith.constant 0 : i32
    %c0_i32_0 = arith.constant 0 : i32
    %c0_i32_1 = arith.constant 0 : i32
    return %c0_i32, %c0_i32_0 : i32, i32
  }
  func.func @transform_6(%arg0: i32) -> (i32, i32) {
    %c0_i32 = arith.constant 0 : i32
    %c0_i32_0 = arith.constant 0 : i32
    return %arg0, %c0_i32 : i32, i32
  }
}

</mosaic_0001>

<llo_original>
// kernel: _forward_rows.1
$region0: #{_forward_rows.1}
  #allocation0 [shape = 'u32[]', space=smem, size = 0x4, offset = 0x4, fixed_abs, tag = 'smem constant byte address 0x4 - core index']
  #allocation1 [shape = 'u32[72,128]{1,0:T(1,128)}', space=vmem, size = 0x9000, scoped, tag = 'internal scratch']
  %s0 = inlined_call_operand.vmem [shape: f32[8,8], index: 0, kind: input, shape index: {}]
  %s1 = inlined_call_operand.vmem [shape: f32[8,128], index: 1, kind: input, shape index: {}]
  %s2 = inlined_call_operand.vmem [shape: f32[8,128], index: 2, kind: input, shape index: {}]
  %s3 = inlined_call_operand.hbm [shape: bf16[128,128], index: 3, kind: input, shape index: {}]
  %s4 = inlined_call_operand.hbm [shape: bf16[128,128], index: 4, kind: input, shape index: {}]
  %s5 = inlined_call_operand.hbm [shape: bf16[128,128], index: 5, kind: input, shape index: {}]
  %s6 = inlined_call_operand.vmem [shape: f32[8,128], index: 6, kind: output, shape index: {}]
  %s7 = sld [smem:[#allocation0]]
  $region46: #{_forward_rows.1} parent=0
    _
  %s9 = ssub.s32 1, %s7
  %s10 = scalar_select 0, %s9, %s7
  $region1: #{_forward_rows.1} parent=0
    #allocation2 [shape = 'u8[32768]{0}', space=vmem, size = 0x8000, scoped, tag = 'input window, operand 3, single buffered']
    #allocation3 [shape = 's32[1]{0}', space=sflag, size = 0x4, scoped, tag = 'scoped memory for _forward_rows.1']
    #allocation4 [shape = 'u8[32768]{0}', space=vmem, size = 0x8000, scoped, tag = 'input window, operand 4, single buffered']
    #allocation5 [shape = 's32[1]{0}', space=sflag, size = 0x4, scoped, tag = 'scoped memory for _forward_rows.1']
    #allocation6 [shape = 'u8[32768]{0}', space=vmem, size = 0x8000, scoped, tag = 'input window, operand 5, single buffered']
    %11 = vsyncpa [#allocation3], 0
    %12 = vsyncpa [#allocation5], 0
    // Predicated region
    $region2: #{_forward_rows.1} parent=1 // pred_check
      _
    $region3: #{_forward_rows.1} parent=1 // pred_check_branch
      %14 = sbr.rel (0) target = $region5
    $region4: #{_forward_rows.1} parent=1 // pred_region
      _
    $region5: #{_forward_rows.1} parent=1 // pred_fallthru
      _
    // Predicated region
    $region6: #{_forward_rows.1} parent=1 // pred_check
      _
    $region7: #{_forward_rows.1} parent=1 // pred_check_branch
      %16 = sbr.rel (0) target = $region9
    $region8: #{_forward_rows.1} parent=1 // pred_region
      _
    $region9: #{_forward_rows.1} parent=1 // pred_fallthru
      _
    // Predicated region
    $region10: #{_forward_rows.1} parent=1 // pred_check
      _
    $region11: #{_forward_rows.1} parent=1 // pred_check_branch
      %18 = sbr.rel (0) target = $region13
    $region12: #{_forward_rows.1} parent=1 // pred_region
      _
    $region13: #{_forward_rows.1} parent=1 // pred_fallthru
      _
    // Predicated region
    $region14: #{_forward_rows.1} parent=1 // pred_check
      _
    $region15: #{_forward_rows.1} parent=1 // pred_check_branch
      %20 = sbr.rel (0) target = $region17
    $region16: #{_forward_rows.1} parent=1 // pred_region
      %22 = vsyncadd [#allocation3], 0
      %s23 = sshll.u32 %s3, 4
      %s24 = int_to_ptr.hbm [resolvable:$true] %s23
      %s25 = sshll.u32 [#allocation2], 4
      %s26 = int_to_ptr.vmem [resolvable:$true] %s25
      %31 = dma.hbm_to_vmem [thread:$0]  %s24, 1024, %s26, [#allocation3], 64, 64, 4
    $region17: #{_forward_rows.1} parent=1 // pred_fallthru
      _
    // Predicated region
    $region18: #{_forward_rows.1} parent=1 // pred_check
      _
    $region19: #{_forward_rows.1} parent=1 // pred_check_branch
      %33 = sbr.rel (0) target = $region21
    $region20: #{_forward_rows.1} parent=1 // pred_region
      %35 = vsyncadd [#allocation5], 0
      %s36 = sshll.u32 %s4, 4
      %s37 = int_to_ptr.hbm [resolvable:$true] %s36
      %s38 = sshll.u32 [#allocation4], 4
      %s39 = int_to_ptr.vmem [resolvable:$true] %s38
      %44 = dma.hbm_to_vmem [thread:$0]  %s37, 1024, %s39, [#allocation5], 64, 64, 4
    $region21: #{_forward_rows.1} parent=1 // pred_fallthru
      _
    // Predicated region
    $region22: #{_forward_rows.1} parent=1 // pred_check
      _
    $region23: #{_forward_rows.1} parent=1 // pred_check_branch
      %46 = sbr.rel (0) target = $region25
    $region24: #{_forward_rows.1} parent=1 // pred_region
      %48 = vsyncadd [#allocation5], 0
      %s49 = sshll.u32 %s5, 4
      %s50 = int_to_ptr.hbm [resolvable:$true] %s49
      %s51 = sshll.u32 [#allocation6], 4
      %s52 = int_to_ptr.vmem [resolvable:$true] %s51
      %57 = dma.hbm_to_vmem [thread:$0]  %s50, 1024, %s52, [#allocation5], 64, 64, 4
    $region25: #{_forward_rows.1} parent=1 // pred_fallthru
      _
    // Predicated region
    $region26: #{_forward_rows.1} parent=1 // pred_check
      _
    $region27: #{_forward_rows.1} parent=1 // pred_check_branch
      %59 = sbr.rel (0) target = $region29
    $region28: #{_forward_rows.1} parent=1 // pred_region
      %61 = dma.done [#allocation3], 1024
    $region29: #{_forward_rows.1} parent=1 // pred_fallthru
      _
    // Predicated region
    $region30: #{_forward_rows.1} parent=1 // pred_check
      _
    $region31: #{_forward_rows.1} parent=1 // pred_check_branch
      %63 = sbr.rel (0) target = $region33
    $region32: #{_forward_rows.1} parent=1 // pred_region
      %65 = dma.done [#allocation5], 1024
    $region33: #{_forward_rows.1} parent=1 // pred_fallthru
      _
    // Predicated region
    $region34: #{_forward_rows.1} parent=1 // pred_check
      _
    $region35: #{_forward_rows.1} parent=1 // pred_check_branch
      %67 = sbr.rel (0) target = $region37
    $region36: #{_forward_rows.1} parent=1 // pred_region
      %69 = dma.done [#allocation5], 1024
    $region37: #{_forward_rows.1} parent=1 // pred_fallthru
      _
    %v71 = vld [vmem:[%s0] sm:$0xff]
    %v72 = vmax.f32 %v71, 0.0
    %v73 = vmin.f32 %v72, 0.084
    %v74 = vld [vmem:[%s1 + $0x3] sm:$0x1]
    %76 = vset.pattern.permute.xlu0 3
    %77 = vperm.xlu0 %76, %v73
    %v78 = vpop.permute.xlu0 %77
    %v80 = vperm.slane %v74, 0
    %v81 = vsub.f32 %v78, %v80
    %v82 = vand.u32 2147483647, %v81
    %v83 = vmul.f32 %v82, 178.57143
    %v84 = vsub.f32 1.0, %v83
    %v85 = vmax.f32 %v84, 0.0
    %v86 = vld [vmem:[%s1 + $0x4] sm:$0x1]
    %v87 = vperm.slane %v86, 0
    %v88 = vmul.f32 %v85, %v87
    %89 = vadd.xlane.f32.xlu0 %v88
    %v90 = vpop.xlane.xlu0 %89
    %v91 = vlaneseq
    %v92 = vand.u32 %v91, 127
    %vm93 = vcmp.eq.s32.totalorder %v92, 2
    %v94 = vsel %vm93, %v90, %v71
    %v95 = vld [vmem:[%s2] sm:$0xff]
    %v96 = vpack.c.bf16 %v95, %v95
    %v97 = vpack.c.bf16 %v94, %v94
    %vm98 = vcmask 64512
    %v100 = vsel %vm98, %v97, 0
    %vm102 = vcmask 1043456
    %v104 = vsel %vm102, %v96, 0
    %106 = vmatpush.bf16.msra.mxu0 0
    %107 = vmatpush.bf16.msra.mxu0 0
    %108 = vmatpush.bf16.msra.mxu0 0
    %109 = vmatpush.bf16.msra.mxu0 0
    %110 = vmatpush.bf16.msra.mxu0 0
    %111 = vmatpush.bf16.msra.mxu0 0
    %112 = vmatpush.bf16.msra.mxu0 0
    %113 = vmatpush.bf16.msra.mxu0 %v104
    %114 = vmatmul.bf16.gmra.mxu0 %v100
    %v115 = vpop.f32.mrf.mxu0
    %v116 = vadd.f32 0.0, %v115
    %v117 = vpop.f32.mrf.mxu0
    %118 = vdwg.mxu0
    %v119 = vsub.f32 0.0, %v116
    %v120 = vmul.f32 %v119, 1.442695
    %v121 = vpow.pop %v120
    %v122 = vadd.f32 %v121, 1.0
    %v123 = vrcp.pop %v122
    %v124 = vpack.c.bf16 %v123, %v123
    %v125 = vld [vmem:[#allocation2] sm:$0xf]
    %v126 = vld [vmem:[#allocation2 + $0x4] sm:$0xf]
    %v127 = vld [vmem:[#allocation2 + $0x8] sm:$0xf]
    %v128 = vld [vmem:[#allocation2 + $0xc] sm:$0xf]
    %v129 = vld [vmem:[#allocation2 + $0x10] sm:$0xf]
    %v130 = vld [vmem:[#allocation2 + $0x14] sm:$0xf]
    %v131 = vld [vmem:[#allocation2 + $0x18] sm:$0xf]
    %v132 = vld [vmem:[#allocation2 + $0x1c] sm:$0xf]
    %v133 = vld [vmem:[#allocation2 + $0x20] sm:$0xf]
    %v134 = vld [vmem:[#allocation2 + $0x24] sm:$0xf]
    %v135 = vld [vmem:[#allocation2 + $0x28] sm:$0xf]
    %v136 = vld [vmem:[#allocation2 + $0x2c] sm:$0xf]
    %v137 = vld [vmem:[#allocation2 + $0x30] sm:$0xf]
    %v138 = vld [vmem:[#allocation2 + $0x34] sm:$0xf]
    %v139 = vld [vmem:[#allocation2 + $0x38] sm:$0xf]
    %v140 = vld [vmem:[#allocation2 + $0x3c] sm:$0xf]
    %v141 = vld [vmem:[%s1] sm:$0x1]
    %v142 = vperm.slane %v141, 0
    %v159 = vunpack.c.l.b16 %v125
    %v160 = vunpack.c.l.b16 %v126
    %v161 = vunpack.c.l.b16 %v127
    %v162 = vunpack.c.l.b16 %v128
    %v163 = vunpack.c.l.b16 %v129
    %v164 = vunpack.c.l.b16 %v130
    %v165 = vunpack.c.l.b16 %v131
    %v166 = vunpack.c.l.b16 %v132
    %v167 = vunpack.c.l.b16 %v133
    %v168 = vunpack.c.l.b16 %v134
    %v169 = vunpack.c.l.b16 %v135
    %v170 = vunpack.c.l.b16 %v136
    %v171 = vunpack.c.l.b16 %v137
    %v172 = vunpack.c.l.b16 %v138
    %v173 = vunpack.c.l.b16 %v139
    %v174 = vunpack.c.l.b16 %v140
    %v175 = vpack.c.b16 %v160, %v159
    %v176 = vpack.c.b16 %v162, %v161
    %v177 = vpack.c.b16 %v164, %v163
    %v178 = vpack.c.b16 %v166, %v165
    %v179 = vpack.c.b16 %v168, %v167
    %v180 = vpack.c.b16 %v170, %v169
    %v181 = vpack.c.b16 %v172, %v171
    %v182 = vpack.c.b16 %v174, %v173
    %191 = vmatpush.bf16.msra.mxu0 %v182
    %192 = vmatpush.bf16.msra.mxu0 %v181
    %193 = vmatpush.bf16.msra.mxu0 %v180
    %194 = vmatpush.bf16.msra.mxu0 %v179
    %195 = vmatpush.bf16.msra.mxu0 %v178
    %196 = vmatpush.bf16.msra.mxu0 %v177
    %197 = vmatpush.bf16.msra.mxu0 %v176
    %198 = vmatpush.bf16.msra.mxu0 %v175
    %199 = vmatmul.bf16.gmra.mxu0 %v124
    %v200 = vpop.f32.mrf.mxu0
    %v201 = vadd.f32 %v142, %v200
    %v202 = vpop.f32.mrf.mxu0
    %203 = vdwg.mxu0
    %v204 = vsub.f32 0.0, %v201
    %v205 = vmul.f32 %v204, 1.442695
    %v206 = vpow.pop %v205
    %v207 = vadd.f32 %v206, 1.0
    %v208 = vrcp.pop %v207
    %v209 = vpack.c.bf16 %v208, %v208
    %v210 = vld [vmem:[#allocation4] sm:$0xf]
    %v211 = vld [vmem:[#allocation4 + $0x4] sm:$0xf]
    %v212 = vld [vmem:[#allocation4 + $0x8] sm:$0xf]
    %v213 = vld [vmem:[#allocation4 + $0xc] sm:$0xf]
    %v214 = vld [vmem:[#allocation4 + $0x10] sm:$0xf]
    %v215 = vld [vmem:[#allocation4 + $0x14] sm:$0xf]
    %v216 = vld [vmem:[#allocation4 + $0x18] sm:$0xf]
    %v217 = vld [vmem:[#allocation4 + $0x1c] sm:$0xf]
    %v218 = vld [vmem:[#allocation4 + $0x20] sm:$0xf]
    %v219 = vld [vmem:[#allocation4 + $0x24] sm:$0xf]
    %v220 = vld [vmem:[#allocation4 + $0x28] sm:$0xf]
    %v221 = vld [vmem:[#allocation4 + $0x2c] sm:$0xf]
    %v222 = vld [vmem:[#allocation4 + $0x30] sm:$0xf]
    %v223 = vld [vmem:[#allocation4 + $0x34] sm:$0xf]
    %v224 = vld [vmem:[#allocation4 + $0x38] sm:$0xf]
    %v225 = vld [vmem:[#allocation4 + $0x3c] sm:$0xf]
    %v226 = vld [vmem:[%s1 + $0x1] sm:$0x1]
    %v227 = vperm.slane %v226, 0
    %v244 = vunpack.c.l.b16 %v210
    %v245 = vunpack.c.l.b16 %v211
    %v246 = vunpack.c.l.b16 %v212
    %v247 = vunpack.c.l.b16 %v213
    %v248 = vunpack.c.l.b16 %v214
    %v249 = vunpack.c.l.b16 %v215
    %v250 = vunpack.c.l.b16 %v216
    %v251 = vunpack.c.l.b16 %v217
    %v252 = vunpack.c.l.b16 %v218
    %v253 = vunpack.c.l.b16 %v219
    %v254 = vunpack.c.l.b16 %v220
    %v255 = vunpack.c.l.b16 %v221
    %v256 = vunpack.c.l.b16 %v222
    %v257 = vunpack.c.l.b16 %v223
    %v258 = vunpack.c.l.b16 %v224
    %v259 = vunpack.c.l.b16 %v225
    %v260 = vpack.c.b16 %v245, %v244
    %v261 = vpack.c.b16 %v247, %v246
    %v262 = vpack.c.b16 %v249, %v248
    %v263 = vpack.c.b16 %v251, %v250
    %v264 = vpack.c.b16 %v253, %v252
    %v265 = vpack.c.b16 %v255, %v254
    %v266 = vpack.c.b16 %v257, %v256
    %v267 = vpack.c.b16 %v259, %v258
    %276 = vmatpush.bf16.msra.mxu0 %v267
    %277 = vmatpush.bf16.msra.mxu0 %v266
    %278 = vmatpush.bf16.msra.mxu0 %v265
    %279 = vmatpush.bf16.msra.mxu0 %v264
    %280 = vmatpush.bf16.msra.mxu0 %v263
    %281 = vmatpush.bf16.msra.mxu0 %v262
    %282 = vmatpush.bf16.msra.mxu0 %v261
    %283 = vmatpush.bf16.msra.mxu0 %v260
    %284 = vmatmul.bf16.gmra.mxu0 %v209
    %v285 = vpop.f32.mrf.mxu0
    %v286 = vadd.f32 %v227, %v285
    %v287 = vpop.f32.mrf.mxu0
    %288 = vdwg.mxu0
    %v289 = vsub.f32 0.0, %v286
    %v290 = vmul.f32 %v289, 1.442695
    %v291 = vpow.pop %v290
    %v292 = vadd.f32 %v291, 1.0
    %v293 = vrcp.pop %v292
    %v294 = vpack.c.bf16 %v293, %v293
    %v295 = vld [vmem:[#allocation6] sm:$0xf]
    %v296 = vld [vmem:[#allocation6 + $0x4] sm:$0xf]
    %v297 = vld [vmem:[#allocation6 + $0x8] sm:$0xf]
    %v298 = vld [vmem:[#allocation6 + $0xc] sm:$0xf]
    %v299 = vld [vmem:[#allocation6 + $0x10] sm:$0xf]
    %v300 = vld [vmem:[#allocation6 + $0x14] sm:$0xf]
    %v301 = vld [vmem:[#allocation6 + $0x18] sm:$0xf]
    %v302 = vld [vmem:[#allocation6 + $0x1c] sm:$0xf]
    %v303 = vld [vmem:[#allocation6 + $0x20] sm:$0xf]
    %v304 = vld [vmem:[#allocation6 + $0x24] sm:$0xf]
    %v305 = vld [vmem:[#allocation6 + $0x28] sm:$0xf]
    %v306 = vld [vmem:[#allocation6 + $0x2c] sm:$0xf]
    %v307 = vld [vmem:[#allocation6 + $0x30] sm:$0xf]
    %v308 = vld [vmem:[#allocation6 + $0x34] sm:$0xf]
    %v309 = vld [vmem:[#allocation6 + $0x38] sm:$0xf]
    %v310 = vld [vmem:[#allocation6 + $0x3c] sm:$0xf]
    %v311 = vld [vmem:[%s1 + $0x2] sm:$0x1]
    %v312 = vperm.slane %v311, 0
    %v329 = vunpack.c.l.b16 %v295
    %v330 = vunpack.c.l.b16 %v296
    %v331 = vunpack.c.l.b16 %v297
    %v332 = vunpack.c.l.b16 %v298
    %v333 = vunpack.c.l.b16 %v299
    %v334 = vunpack.c.l.b16 %v300
    %v335 = vunpack.c.l.b16 %v301
    %v336 = vunpack.c.l.b16 %v302
    %v337 = vunpack.c.l.b16 %v303
    %v338 = vunpack.c.l.b16 %v304
    %v339 = vunpack.c.l.b16 %v305
    %v340 = vunpack.c.l.b16 %v306
    %v341 = vunpack.c.l.b16 %v307
    %v342 = vunpack.c.l.b16 %v308
    %v343 = vunpack.c.l.b16 %v309
    %v344 = vunpack.c.l.b16 %v310
    %v345 = vpack.c.b16 %v330, %v329
    %v346 = vpack.c.b16 %v332, %v331
    %v347 = vpack.c.b16 %v334, %v333
    %v348 = vpack.c.b16 %v336, %v335
    %v349 = vpack.c.b16 %v338, %v337
    %v350 = vpack.c.b16 %v340, %v339
    %v351 = vpack.c.b16 %v342, %v341
    %v352 = vpack.c.b16 %v344, %v343
    %361 = vmatpush.bf16.msra.mxu0 %v352
    %362 = vmatpush.bf16.msra.mxu0 %v351
    %363 = vmatpush.bf16.msra.mxu0 %v350
    %364 = vmatpush.bf16.msra.mxu0 %v349
    %365 = vmatpush.bf16.msra.mxu0 %v348
    %366 = vmatpush.bf16.msra.mxu0 %v347
    %367 = vmatpush.bf16.msra.mxu0 %v346
    %368 = vmatpush.bf16.msra.mxu0 %v345
    %369 = vmatmul.bf16.gmra.mxu0 %v294
    %v370 = vpop.f32.mrf.mxu0
    %v371 = vadd.f32 %v312, %v370
    %v372 = vpop.f32.mrf.mxu0
    %373 = vdwg.mxu0
    %374 = vst [vmem:[%s6] sm:$0xff] %v371
    // Predicated region
    $region38: #{_forward_rows.1} parent=1 // pred_check
      _
    $region39: #{_forward_rows.1} parent=1 // pred_check_branch
      %376 = sbr.rel (0) target = $region41
    $region40: #{_forward_rows.1} parent=1 // pred_region
      _
    $region41: #{_forward_rows.1} parent=1 // pred_fallthru
      _
    // Predicated region
    $region42: #{_forward_rows.1} parent=1 // pred_check
      _
    $region43: #{_forward_rows.1} parent=1 // pred_check_branch
      %378 = sbr.rel (0) target = $region45
    $region44: #{_forward_rows.1} parent=1 // pred_region
      _
    $region45: #{_forward_rows.1} parent=1 // pred_fallthru
      _
    %379 = vsyncpa [#allocation3], 1
    %380 = vsyncpa [#allocation5], 1

</llo_original>
